<compile_context>
chip_gen: v5e
topology: v5e:2x2
jax: 0.10.0
libtpu: 0.0.40
codegen_flags: <defaults>
</compile_context>

<pallas_src>
import numpy as np
import jax
import jax.numpy as jnp
from jax.experimental import pallas as pl
from jax.experimental.pallas import tpu as pltpu

_LANES = 128                       # TPU vreg lane width (last dim lane-dense)
_SUBLANE_MULT = 32                 # covers f32(8) / bf16(16) / int8,fp8(32) tiles
_PER_TILE_BUDGET = 6 * 1024 * 1024  # bytes per block; 2 arrays x 2 bufs = ~24 MiB
_VMEM_LIMIT = 40 * 1024 * 1024     # < v7x 64 MiB physical; overrides v5e default
_MIN_GRID_STEPS = 4                # feed software pipeline + both v7x TCs


def _copy_kernel(x_ref, o_ref):
    # Identity copy: the reshape itself is metadata; this kernel only
    # materializes the output slab tile-by-tile.
    o_ref[...] = x_ref[...]


def _round_up(x, m):
    return -(-x // m) * m


def _pallas_materialize(x):
    """Return a fresh buffer with the same shape/dtype/values as `x` via a
    lane-dense tiled Pallas copy (the reshape stays metadata-only)."""
    orig_shape = x.shape
    total = int(np.prod(orig_shape)) if len(orig_shape) > 0 else 1
    if total == 0:
        return jnp.reshape(x, orig_shape)  # zero-size: nothing to copy

    itemsize = jnp.dtype(x.dtype).itemsize
    cost = pl.CostEstimate(flops=0, transcendentals=0,
                           bytes_accessed=2 * total * itemsize)
    cparams = pltpu.CompilerParams(
        dimension_semantics=("parallel",),
        vmem_limit_bytes=_VMEM_LIMIT,
    )

    if total % _LANES == 0:
        # Preferred path: flat (rows, 128) lane-dense slab, tiled over rows.
        rows = total // _LANES
        if rows <= _SUBLANE_MULT:
            tile_rows = rows  # full-dim block (always legal)
        else:
            # Largest row-tile that fits the per-tile byte budget, rounded to
            # a multiple of 32 sublanes.
            budget_rows = max(
                _SUBLANE_MULT,
                (_PER_TILE_BUDGET // (_LANES * itemsize))
                // _SUBLANE_MULT * _SUBLANE_MULT)
            # Keep >= ~_MIN_GRID_STEPS grid steps so prefetch/writeback
            # overlap and the "parallel" axis can shard across v7x cores.
            target_rows = max(_SUBLANE_MULT,
                              _round_up(pl.cdiv(rows, _MIN_GRID_STEPS),
                                        _SUBLANE_MULT))
            tile_rows = min(budget_rows, target_rows)

        x2 = jnp.reshape(x, (rows, _LANES))  # metadata-only view
        y2 = pl.pallas_call(
            _copy_kernel,
            out_shape=jax.ShapeDtypeStruct((rows, _LANES), x.dtype),
            grid=(pl.cdiv(rows, tile_rows),),
            in_specs=[pl.BlockSpec((tile_rows, _LANES), lambda i: (i, 0))],
            out_specs=pl.BlockSpec((tile_rows, _LANES), lambda i: (i, 0)),
            compiler_params=cparams,
            cost_estimate=cost,
        )(x2)
        return jnp.reshape(y2, orig_shape)  # metadata-only

    # Fallback (total not a multiple of 128): view as (1, total) and tile the
    # lane axis.  (1, N) blocks pad to 8 sublanes in VMEM, so the per-tile
    # element cap is reduced accordingly; a partial last block (if any) is a
    # masked store, which is negligible for this rare path.
    cap_elems = max(_LANES,
                    (_PER_TILE_BUDGET // (8 * itemsize)) // _LANES * _LANES)
    tile_cols = total if total <= cap_elems else cap_elems

    x2 = jnp.reshape(x, (1, total))  # metadata-only view
    y2 = pl.pallas_call(
        _copy_kernel,
        out_shape=jax.ShapeDtypeStruct((1, total), x.dtype),
        grid=(pl.cdiv(total, tile_cols),),
        in_specs=[pl.BlockSpec((1, tile_cols), lambda i: (0, i))],
        out_specs=pl.BlockSpec((1, tile_cols), lambda i: (0, i)),
        compiler_params=cparams,
        cost_estimate=cost,
    )(x2)
    return jnp.reshape(y2, orig_shape)  # metadata-only


def reshape_forward(inputs, mode="flatten", target_shape=None,
                    materialize=False):
    """JAX equivalent of ReShape.forward.

    materialize=False (default): metadata-only reshape (recommended; no HBM
    traffic, matches torch.flatten/torch.reshape row-major semantics exactly).
    materialize=True: additionally produce a fresh buffer via the lane-dense
    Pallas copy kernel.
    """
    mode = mode.lower()
    assert mode in ["flatten", "reconstruct"], (
        f"Do not support mode {mode} for ReShape module")

    if mode == "flatten":
        B = inputs.shape[0]
        N = int(np.prod(inputs.shape[1:])) if inputs.ndim > 1 else 1
        final_shape = (B, N)
    else:
        assert target_shape is not None and len(target_shape) == 3, (
            "Target shape for 'reconstruct' mode should be 3 dimension")
        tail = int(np.prod(target_shape))
        total = int(np.prod(inputs.shape))
        assert total % tail == 0
        final_shape = (total // tail,) + tuple(target_shape)

    # Hot path: row-major reshape is metadata-only in XLA (zero HBM traffic).
    y = jnp.reshape(inputs, final_shape)

    if materialize:
        y = _pallas_materialize(y)
    return y


if __name__ == "__main__":
    key = jax.random.PRNGKey(0)
    k0, k1 = jax.random.split(key)

    # Small NCHW input consistent with a conv feature map: B=2, C=4, H=W=16.
    x = jax.random.normal(k0, (2, 4, 16, 16), dtype=jnp.float32)
    ref_flat = jnp.reshape(x, (2, -1))

    # Default fast path: metadata-only flatten (2, 4, 16, 16) -> (2, 1024).
    y_flat = jax.block_until_ready(reshape_forward(x, mode="flatten"))
    assert y_flat.shape == (2, 1024)
    assert y_flat.dtype == x.dtype
    np.testing.assert_array_equal(np.asarray(y_flat), np.asarray(ref_flat))

    # Materialized path: exercises the lane-dense (rows, 128) Pallas copy.
    y_flat_k = jax.block_until_ready(
        reshape_forward(x, mode="flatten", materialize=True))
    assert y_flat_k.shape == (2, 1024)
    np.testing.assert_array_equal(np.asarray(y_flat_k), np.asarray(ref_flat))

    # mode="reconstruct": (2, 1024) -> (-1, 4, 16, 16), through the kernel.
    y_rec = jax.block_until_ready(
        reshape_forward(y_flat_k, mode="reconstruct",
                        target_shape=(4, 16, 16), materialize=True))
    assert y_rec.shape == (2, 4, 16, 16)
    np.testing.assert_array_equal(np.asarray(y_rec), np.asarray(x))

    # Non-128-aligned element count: exercises the (1, total) fallback copy.
    xu = jax.random.normal(k1, (2, 3, 5, 7), dtype=jnp.float32)  # 210 elems
    yu = jax.block_until_ready(
        reshape_forward(xu, mode="flatten", materialize=True))
    assert yu.shape == (2, 105)
    np.testing.assert_array_equal(np.asarray(yu),
                                  np.asarray(jnp.reshape(xu, (2, -1))))

    print("KERNEL_OK")
</pallas_src>

<mosaic_0001>
module attributes {stable_mosaic.version = 11 : i64} {
  func.func @_copy_kernel(%arg0: i32, %arg1: memref<16x128xf32, #tpu.memory_space<vmem>>, %arg2: memref<16x128xf32, #tpu.memory_space<vmem>>) attributes {dimension_semantics = [#tpu.dimension_semantics<parallel>], iteration_bounds = array<i64: 1>, scalar_prefetch = 0 : i64, scratch_operands = 0 : i64, tpu.core_type = #tpu.core_type<tc>, window_params = [{transform_indices = @transform_0, window_bounds = array<i64: 16, 128>}, {transform_indices = @transform_1, window_bounds = array<i64: 16, 128>}]} {
    %c0 = arith.constant 0 : index
    %c0_0 = arith.constant 0 : index
    %0 = vector.load %arg1[%c0, %c0_0] : memref<16x128xf32, #tpu.memory_space<vmem>>, vector<16x128xf32>
    %c0_1 = arith.constant 0 : index
    %c0_2 = arith.constant 0 : index
    %1 = vector.load %arg2[%c0_1, %c0_2] : memref<16x128xf32, #tpu.memory_space<vmem>>, vector<16x128xf32>
    tpu.vector_store %arg2[%c0_1, %c0_2], %0 {strides = array<i32>} : memref<16x128xf32, #tpu.memory_space<vmem>>, vector<16x128xf32>,
    return
  }
  func.func @transform_0(%arg0: i32) -> (i32, i32) {
    %c0_i32 = arith.constant 0 : i32
    %c0_i32_0 = arith.constant 0 : i32
    return %arg0, %c0_i32 : i32, i32
  }
  func.func @transform_1(%arg0: i32) -> (i32, i32) {
    %c0_i32 = arith.constant 0 : i32
    %c0_i32_0 = arith.constant 0 : i32
    return %arg0, %c0_i32 : i32, i32
  }
}

</mosaic_0001>

<llo_original>
// kernel: tpu_custom_call.1
$region0: #{tpu_custom_call.1}
  #allocation0 [shape = 'u32[]', space=smem, size = 0x4, offset = 0x4, fixed_abs, tag = 'smem constant byte address 0x4 - core index']
  #allocation1 [shape = 'u32[72,128]{1,0:T(1,128)}', space=vmem, size = 0x9000, scoped, tag = 'internal scratch']
  %s0 = inlined_call_operand.hbm [shape: f32[16,128], index: 0, kind: input, shape index: {}]
  %s1 = inlined_call_operand.hbm [shape: f32[16,128], index: 1, kind: output, shape index: {}]
  %s2 = sld [smem:[#allocation0]]
  $region18: #{tpu_custom_call.1} parent=0
    _
  %s4 = ssub.s32 1, %s2
  %s5 = scalar_select 0, %s4, %s2
  $region1: #{tpu_custom_call.1} parent=0
    #allocation2 [shape = 'u8[8192]{0}', space=vmem, size = 0x2000, scoped, tag = 'input window, operand 0, single buffered']
    #allocation3 [shape = 's32[1]{0}', space=sflag, size = 0x4, scoped, tag = 'scoped memory for tpu_custom_call.1']
    #allocation4 [shape = 's32[1]{0}', space=sflag, size = 0x4, scoped, tag = 'scoped memory for tpu_custom_call.1']
    #allocation5 [shape = 'u8[8192]{0}', space=vmem, size = 0x2000, scoped, tag = 'output window, operand 0, single buffered']
    %6 = vsyncpa [#allocation3], 0
    %7 = vsyncpa [#allocation4], 0
    // Predicated region
    $region2: #{tpu_custom_call.1} parent=1 // pred_check
      _
    $region3: #{tpu_custom_call.1} parent=1 // pred_check_branch
      %9 = sbr.rel (0) target = $region5
    $region4: #{tpu_custom_call.1} parent=1 // pred_region
      %11 = vsyncadd [#allocation3], 0
      %s12 = sshll.u32 %s0, 4
      %s13 = int_to_ptr.hbm [resolvable:$true] %s12
      %s14 = sshll.u32 [#allocation2], 4
      %s15 = int_to_ptr.vmem [resolvable:$true] %s14
      %20 = dma.hbm_to_vmem [thread:$0]  %s13, 256, %s15, [#allocation3], 128, 128, 8
    $region5: #{tpu_custom_call.1} parent=1 // pred_fallthru
      _
    // Predicated region
    $region6: #{tpu_custom_call.1} parent=1 // pred_check
      _
    $region7: #{tpu_custom_call.1} parent=1 // pred_check_branch
      %22 = sbr.rel (0) target = $region9
    $region8: #{tpu_custom_call.1} parent=1 // pred_region
      %24 = dma.done [#allocation3], 256
    $region9: #{tpu_custom_call.1} parent=1 // pred_fallthru
      _
    %v25 = vld [vmem:[#allocation2] sm:$0xff]
    %v26 = vld [vmem:[#allocation2 + $0x8] sm:$0xff]
    %27 = vst [vmem:[#allocation5] sm:$0xff] %v25
    %28 = vst [vmem:[#allocation5 + $0x8] sm:$0xff] %v26
    // Predicated region
    $region10: #{tpu_custom_call.1} parent=1 // pred_check
      _
    $region11: #{tpu_custom_call.1} parent=1 // pred_check_branch
      %30 = sbr.rel (0) target = $region13
    $region12: #{tpu_custom_call.1} parent=1 // pred_region
      %32 = vsyncadd [#allocation4], 0
      %s33 = sshll.u32 [#allocation5], 4
      %s34 = int_to_ptr.vmem [resolvable:$true] %s33
      %s35 = sshll.u32 %s1, 4
      %s36 = int_to_ptr.hbm [resolvable:$true] %s35
      %41 = dma.vmem_to_hbm [thread:$0]  %s34, 256, %s36, [#allocation4], 128, 128, 8
    $region13: #{tpu_custom_call.1} parent=1 // pred_fallthru
      _
    // Predicated region
    $region14: #{tpu_custom_call.1} parent=1 // pred_check
      _
    $region15: #{tpu_custom_call.1} parent=1 // pred_check_branch
      %43 = sbr.rel (0) target = $region17
    $region16: #{tpu_custom_call.1} parent=1 // pred_region
      %45 = dma.done [#allocation4], 256
    $region17: #{tpu_custom_call.1} parent=1 // pred_fallthru
      _
    %46 = vsyncpa [#allocation3], 1
    %47 = vsyncpa [#allocation4], 1

</llo_original>
